<compile_context>
chip_gen: v6e
topology: v6e:2x2x1
jax: 0.10.0
libtpu: 0.0.40
codegen_flags: <defaults>
</compile_context>

<pallas_src>
import functools

import jax
import jax.numpy as jnp
from jax import lax
from jax.experimental import pallas as pl
from jax.experimental.pallas import tpu as pltpu


def _round_up(x, m):
    return (x + m - 1) // m * m


def _nt_xent_rowsum_kernel(row_ref, col_ref, out_ref, *, lane_groups):
    """Grid point (i, j): accumulate per-row, per-lane sums of exp(sim/T).

    row_ref: (tm, Dp) pre-normalized rows, already scaled by 1/T (mm dtype).
    col_ref: (tn, Dp) pre-normalized columns (mm dtype).
    out_ref: (tm, 128) f32 lane-group partial sums (resident across j).
    """
    j = pl.program_id(1)

    @pl.when(j == 0)
    def _init():
        out_ref[...] = jnp.zeros_like(out_ref)

    # (tm, tn) similarity tile (already divided by T) on the MXU; the
    # contraction is expressed on the last dims of both operands ('nt' form)
    # so no transpose is materialized.
    sim = lax.dot_general(
        row_ref[...], col_ref[...],
        dimension_numbers=(((1,), (1,)), ((), ())),
        preferred_element_type=jnp.float32)
    e = jnp.exp(sim)

    # Deferred reduction: fold the tn/128 lane groups into the (tm, 128)
    # accumulator with pure VPU adds (no per-step cross-lane XLU reduce).
    acc = out_ref[...]
    for g in range(lane_groups):
        acc = acc + e[:, g * 128:(g + 1) * 128]
    out_ref[...] = acc


def contrastive_loss_eli5(emb_i, emb_j, temperature=0.5, *,
                          block_rows=256, use_bf16_matmul=True):
    """JAX/Pallas equivalent of ContrastiveLossELI5.forward."""
    assert emb_i.shape == emb_j.shape and emb_i.ndim == 2
    n, d = emb_i.shape
    inv_t = float(1.0 / temperature)

    dp = _round_up(d, 128)                       # lane-pad embedding dim
    mm_dtype = jnp.bfloat16 if use_bf16_matmul else jnp.float32
    mm_bytes = 2 if use_bf16_matmul else 4

    # Tile floors: tm in [128, 512] (multiple of 128), tn = 256.  Shrink tm if
    # the per-block working set would blow a v7x-safe VMEM budget.
    tn = 256
    tm = max(128, min(_round_up(block_rows, 128), 512))

    def est_bytes(tm_, tn_):
        return (2 * tm_ * dp * mm_bytes        # double-buffered row tiles
                + 2 * tn_ * dp * mm_bytes      # double-buffered column tiles
                + 2 * tm_ * 128 * 4            # output (accumulator) block
                + 4 * tm_ * tn_ * 4)           # sim / exp temporaries headroom

    while tm > 128 and est_bytes(tm, tn) > 40 * 2**20:
        tm -= 128

    half = _round_up(n, tm)                      # padded rows per half
    two_np = 2 * half                            # multiple of 2*tm (and of 256)
    nb_rows = two_np // tm                       # >= 2 row blocks (megacore)
    nb_cols = two_np // tn

    # ---- Hoisted preprocessing (wrapper, plain XLA) --------------------------
    zi = emb_i.astype(jnp.float32)
    zj = emb_j.astype(jnp.float32)
    zi_n = zi / jnp.maximum(
        jnp.sqrt(jnp.sum(zi * zi, axis=1, keepdims=True)), 1e-12)
    zj_n = zj / jnp.maximum(
        jnp.sqrt(jnp.sum(zj * zj, axis=1, keepdims=True)), 1e-12)

    # Positive-pair similarity (numerator term), full f32 precision.
    pos = jnp.sum(zi_n * zj_n, axis=1)           # (n,)

    zi_p = jnp.pad(zi_n, ((0, half - n), (0, dp - d)))
    zj_p = jnp.pad(zj_n, ((0, half - n), (0, dp - d)))
    reps_n = jnp.concatenate([zi_p, zj_p], axis=0)          # (2Np, Dp) f32

    cols = reps_n.astype(mm_dtype)                           # column operand
    rows_scaled = (reps_n * inv_t).astype(mm_dtype)          # rows, folded 1/T

    # Self term consistent with the in-kernel diagonal: same rounded operands.
    self_scaled = jnp.sum(rows_scaled.astype(jnp.float32)
                          * cols.astype(jnp.float32), axis=1)  # (2Np,)

    # ---- Pallas call: per-row lane-group sums of exp(sim/T) ------------------
    est = est_bytes(tm, tn)
    vmem_limit = int(min(48 * 2**20, max(2 * est, 16 * 2**20)))

    kernel = functools.partial(_nt_xent_rowsum_kernel, lane_groups=tn // 128)

    lane_sums = pl.pallas_call(
        kernel,
        out_shape=jax.ShapeDtypeStruct((two_np, 128), jnp.float32),
        grid_spec=pltpu.PrefetchScalarGridSpec(
            num_scalar_prefetch=0,
            grid=(nb_rows, nb_cols),
            in_specs=[
                # row tile (constant across j -> DMA'd once per row block)
                pl.BlockSpec((tm, dp), lambda i, j: (i, 0)),
                # column tile (reduction axis)
                pl.BlockSpec((tn, dp), lambda i, j: (j, 0)),
            ],
            # Lane-dense output block doubles as the accumulator across j.
            out_specs=pl.BlockSpec((tm, 128), lambda i, j: (i, 0)),
        ),
        compiler_params=pltpu.CompilerParams(
            dimension_semantics=("parallel", "arbitrary"),
            vmem_limit_bytes=vmem_limit,
        ),
    )(rows_scaled, cols)

    # ---- Tiny epilogue over 2N rows -----------------------------------------
    row_sums = jnp.sum(lane_sums, axis=1)                     # (2Np,)
    n_pad_cols = 2.0 * (half - n)                             # each adds exp(0)=1
    denom = row_sums - jnp.exp(self_scaled) - n_pad_cols      # sum over k != r

    pos_half = jnp.pad(pos, (0, half - n))
    pos_full = jnp.concatenate([pos_half, pos_half])          # (2Np,)
    loss_rows = jnp.log(jnp.maximum(denom, 1e-30)) - pos_full * inv_t

    valid_half = jnp.arange(half) < n
    row_valid = jnp.concatenate([valid_half, valid_half])
    total = jnp.sum(jnp.where(row_valid, loss_rows, 0.0))
    return total / (2.0 * n)


def _reference_loss(emb_i, emb_j, temperature=0.5):
    """Pure-JAX reference mirroring the PyTorch loop semantics."""
    def norm(x):
        return x / jnp.maximum(jnp.linalg.norm(x, axis=1, keepdims=True), 1e-12)

    reps = jnp.concatenate([norm(emb_i), norm(emb_j)], axis=0)
    sim = jnp.matmul(reps, reps.T, precision=lax.Precision.HIGHEST)
    n = emb_i.shape[0]
    two_n = 2 * n

    def l_ij(i, j):
        numerator = jnp.exp(sim[i, j] / temperature)
        mask = jnp.ones((two_n,)).at[i].set(0.0)
        denominator = jnp.sum(mask * jnp.exp(sim[i, :] / temperature))
        return -jnp.log(numerator / denominator)

    loss = 0.0
    for k in range(n):
        loss += l_ij(k, k + n) + l_ij(k + n, k)
    return loss / (2 * n)


if __name__ == "__main__":
    key = jax.random.PRNGKey(0)
    k1, k2 = jax.random.split(key)

    # Small, deterministic example: batch N=8 pairs, embedding dim D=32.
    N, D = 8, 32
    emb_i = jax.random.normal(k1, (N, D), dtype=jnp.float32)
    emb_j = jax.random.normal(k2, (N, D), dtype=jnp.float32)
    ref = _reference_loss(emb_i, emb_j, temperature=0.5)

    # Exact path: f32 MXU inputs.
    loss_f32 = jax.block_until_ready(
        contrastive_loss_eli5(emb_i, emb_j, temperature=0.5,
                              use_bf16_matmul=False))
    assert jnp.allclose(loss_f32, ref, rtol=1e-4, atol=1e-4), (loss_f32, ref)

    # Fast path (default): bf16 MXU inputs, f32 accumulation.
    loss_bf16 = jax.block_until_ready(
        contrastive_loss_eli5(emb_i, emb_j, temperature=0.5))
    assert jnp.allclose(loss_bf16, ref, rtol=2e-2, atol=2e-2), (loss_bf16, ref)

    # Ragged case: exercises row/column padding handled via the constant
    # padded-column correction (no in-kernel mask).
    N2, D2 = 6, 48
    e1 = jax.random.normal(k1, (N2, D2), dtype=jnp.float32)
    e2 = jax.random.normal(k2, (N2, D2), dtype=jnp.float32)
    ref2 = _reference_loss(e1, e2, temperature=0.5)
    loss2 = jax.block_until_ready(
        contrastive_loss_eli5(e1, e2, temperature=0.5, use_bf16_matmul=False))
    assert jnp.allclose(loss2, ref2, rtol=1e-4, atol=1e-4), (loss2, ref2)

    print("KERNEL_OK")
</pallas_src>

<mosaic_0001>
module attributes {stable_mosaic.version = 11 : i64} {
  func.func @_nt_xent_rowsum_kernel(%arg0: i32, %arg1: i32, %arg2: memref<256x128xf32, #tpu.memory_space<vmem>>, %arg3: memref<256x128xf32, #tpu.memory_space<vmem>>, %arg4: memref<256x128xf32, #tpu.memory_space<vmem>>) attributes {dimension_semantics = [#tpu.dimension_semantics<parallel>, #tpu.dimension_semantics<arbitrary>], iteration_bounds = array<i64: 2, 2>, scalar_prefetch = 0 : i64, scratch_operands = 0 : i64, tpu.core_type = #tpu.core_type<tc>, window_params = [{transform_indices = @transform_0, window_bounds = array<i64: 256, 128>}, {transform_indices = @transform_1, window_bounds = array<i64: 256, 128>}, {transform_indices = @transform_2, window_bounds = array<i64: 256, 128>}]} {
    %c0_i32 = arith.constant 0 : i32
    %0 = arith.cmpi eq, %arg1, %c0_i32 : i32
    %1 = arith.extui %0 : i1 to i32
    %c0_i32_0 = arith.constant 0 : i32
    %2 = arith.cmpi ne, %1, %c0_i32_0 : i32
    scf.if %2 {
      %cst_8 = arith.constant 0.000000e+00 : f32
      %13 = vector.broadcast %cst_8 : f32 to vector<256x128xf32>
      %c0_9 = arith.constant 0 : index
      %c0_10 = arith.constant 0 : index
      %14 = vector.load %arg4[%c0_9, %c0_10] : memref<256x128xf32, #tpu.memory_space<vmem>>, vector<256x128xf32>
      tpu.vector_store %arg4[%c0_9, %c0_10], %13 {strides = array<i32>} : memref<256x128xf32, #tpu.memory_space<vmem>>, vector<256x128xf32>,
    } else {
    }
    %c0 = arith.constant 0 : index
    %c0_1 = arith.constant 0 : index
    %3 = vector.load %arg2[%c0, %c0_1] : memref<256x128xf32, #tpu.memory_space<vmem>>, vector<256x128xf32>
    %c0_2 = arith.constant 0 : index
    %c0_3 = arith.constant 0 : index
    %4 = vector.load %arg3[%c0_2, %c0_3] : memref<256x128xf32, #tpu.memory_space<vmem>>, vector<256x128xf32>
    %cst = arith.constant dense<0.000000e+00> : vector<256x256xf32>
    %5 = tpu.matmul %3, %4, %cst {dimension_numbers = #tpu.dot_dimension_numbers<[1], [1], [0], [0], [0, 0, 1, 0], [], []>} : vector<256x128xf32>, vector<256x128xf32>, vector<256x256xf32> -> vector<256x256xf32>
    %6 = math.exp %5 : vector<256x256xf32>
    %c0_4 = arith.constant 0 : index
    %c0_5 = arith.constant 0 : index
    %7 = vector.load %arg4[%c0_4, %c0_5] : memref<256x128xf32, #tpu.memory_space<vmem>>, vector<256x128xf32>
    %8 = vector.extract_strided_slice %6 {offsets = [0, 0], sizes = [256, 128], strides = [1, 1]} : vector<256x256xf32> to vector<256x128xf32>
    %9 = arith.addf %7, %8 : vector<256x128xf32>
    %10 = vector.extract_strided_slice %6 {offsets = [0, 128], sizes = [256, 128], strides = [1, 1]} : vector<256x256xf32> to vector<256x128xf32>
    %11 = arith.addf %9, %10 : vector<256x128xf32>
    %c0_6 = arith.constant 0 : index
    %c0_7 = arith.constant 0 : index
    %12 = vector.load %arg4[%c0_6, %c0_7] : memref<256x128xf32, #tpu.memory_space<vmem>>, vector<256x128xf32>
    tpu.vector_store %arg4[%c0_6, %c0_7], %11 {strides = array<i32>} : memref<256x128xf32, #tpu.memory_space<vmem>>, vector<256x128xf32>,
    return
  }
  func.func @transform_0(%arg0: i32, %arg1: i32) -> (i32, i32) {
    %c0_i32 = arith.constant 0 : i32
    %c0_i32_0 = arith.constant 0 : i32
    return %arg0, %c0_i32 : i32, i32
  }
  func.func @transform_1(%arg0: i32, %arg1: i32) -> (i32, i32) {
    %c0_i32 = arith.constant 0 : i32
    %c0_i32_0 = arith.constant 0 : i32
    return %arg1, %c0_i32 : i32, i32
  }
  func.func @transform_2(%arg0: i32, %arg1: i32) -> (i32, i32) {
    %c0_i32 = arith.constant 0 : i32
    %c0_i32_0 = arith.constant 0 : i32
    return %arg0, %c0_i32 : i32, i32
  }
}

</mosaic_0001>

<llo_original>
// kernel: tpu_custom_call.1
$region0: #{tpu_custom_call.1}
  #allocation0 [shape = 'u32[]', space=smem, size = 0x4, offset = 0x4, fixed_abs, tag = 'smem constant byte address 0x4 - core index']
  #allocation1 [shape = 'u32[144,128]{1,0:T(1,128)}', space=vmem, size = 0x12000, scoped, tag = 'internal scratch']
  %s0 = inlined_call_operand.hbm [shape: f32[512,128], index: 0, kind: input, shape index: {}]
  %s1 = inlined_call_operand.hbm [shape: f32[512,128], index: 1, kind: input, shape index: {}]
  %s2 = inlined_call_operand.hbm [shape: f32[512,128], index: 2, kind: output, shape index: {}]
  %s3 = sld [smem:[#allocation0]]
  $region53: #{tpu_custom_call.1} parent=0
    _
  %s5 = ssub.s32 1, %s3
  %s6 = scalar_select 0, %s5, %s3
  $region1: #{tpu_custom_call.1} parent=0
    #allocation2 [shape = 'u8[262144]{0}', space=vmem, size = 0x40000, scoped, tag = 'input window, operand 0']
    #allocation3 [shape = 's32[2]{0}', space=sflag, size = 0x8, scoped, tag = 'scoped memory for tpu_custom_call.1']
    #allocation4 [shape = 's32[2]{0}', space=sflag, size = 0x8, scoped, tag = 'scoped memory for tpu_custom_call.1']
    #allocation5 [shape = 'u8[262144]{0}', space=vmem, size = 0x40000, scoped, tag = 'input window, operand 1']
    #allocation6 [shape = 's32[2]{0}', space=sflag, size = 0x8, scoped, tag = 'scoped memory for tpu_custom_call.1']
    #allocation7 [shape = 'u8[262144]{0}', space=vmem, size = 0x40000, scoped, tag = 'output window, operand 0']
    %7 = vsyncpa [#allocation3], 0
    %s8 = scalar_lea.sflag [#allocation3], 1
    %9 = vsyncpa %s8, 0
    %10 = vsyncpa [#allocation6], 0
    %s11 = scalar_lea.sflag [#allocation6], 1
    %12 = vsyncpa %s11, 0
    %13 = vsyncpa [#allocation4], 0
    %s14 = scalar_lea.sflag [#allocation4], 1
    %15 = vsyncpa %s14, 0
    loop: start=0, step=1, limit=6
    $region2: #{tpu_custom_call.1} parent=1 // loop_pre_header
      _
    $region3: #{tpu_custom_call.1} parent=1 // loop_header
      %s17 = sphi 0, %s21
      %p18 = scmp.ge.s32.totalorder %s17, 6
      %s24 = sphi 0, %s36
      %s25 = sphi 0, %s32
      %s26 = sphi 0, %s24
      %s27 = sphi 0, %s25
      %s28 = sphi 0, %s26
      %s29 = sphi 0, %s27
      %s39 = sphi 0, %s41
      %s42 = sphi 0, %s39
      %s43 = sphi 0, %s42
      %s59 = sphi 0, %s43
      %s65 = sphi 0, %s67
      %s68 = sphi 0, %s65
      %s69 = sphi 0, %s68
      %s85 = sphi 0, %s69
      %s91 = sphi 0, %s93
      %s94 = sphi 0, %s91
      %s95 = sphi 0, %s94
      %s111 = sphi 0, %s95
    $region4: #{tpu_custom_call.1} parent=1 // loop_header_branch
      %20 = sbr.rel (%p18) target = $region8
    $region5: #{tpu_custom_call.1} parent=1 // loop_body
      %s22 = ssub.s32 %s17, 1
      %s23 = ssub.s32 %s17, 2
      %s30 = sadd.s32 1, %s25
      %p31 = scmp.ge.s32.totalorder %s30, 2
      %s32 = scalar_select %p31, 0, %s30
      %s33 = sadd.s32 1, %s24
      %s34 = scalar_select %p31, %s33, %s24
      %p35 = scmp.ge.s32.totalorder %s34, 2
      %s36 = scalar_select %p35, 0, %s34
      %s37 = ssub.s32 %s24, %s36
      %p38 = scmp.eq.s32.totalorder %s37, 0
      %s40 = sadd.s32 %s39, 1
      %s41 = scalar_select %p38, %s39, %s40
      %p44 = pneg %p38
      %p45 = scmp.eq.s32.totalorder %s17, 3
      %p46 = por %p44, %p45
      %p47 = scmp.ne.s32.totalorder %s39, %s42
      %p48 = scmp.eq.s32.totalorder %s17, 0
      %p49 = por %p47, %p48
      %p50 = scmp.ne.s32.totalorder %s39, %s42
      %p51 = scmp.eq.s32.totalorder %s22, 3
      %p52 = por %p50, %p51
      %p53 = scmp.ne.s32.totalorder %s42, %s43
      %p54 = scmp.eq.s32.totalorder %s22, 0
      %p55 = por %p53, %p54
      %p56 = scmp.ne.s32.totalorder %s42, %s43
      %p57 = scmp.eq.s32.totalorder %s23, 3
      %p58 = por %p56, %p57
      %p60 = scmp.ne.s32.totalorder %s43, %s59
      %p61 = scmp.eq.s32.totalorder %s23, 0
      %p62 = por %p60, %p61
      %s63 = ssub.s32 %s25, %s32
      %p64 = scmp.eq.s32.totalorder %s63, 0
      %s66 = sadd.s32 %s65, 1
      %s67 = scalar_select %p64, %s65, %s66
      %p70 = pneg %p64
      %p71 = scmp.eq.s32.totalorder %s17, 3
      %p72 = por %p70, %p71
      %p73 = scmp.ne.s32.totalorder %s65, %s68
      %p74 = scmp.eq.s32.totalorder %s17, 0
      %p75 = por %p73, %p74
      %p76 = scmp.ne.s32.totalorder %s65, %s68
      %p77 = scmp.eq.s32.totalorder %s22, 3
      %p78 = por %p76, %p77
      %p79 = scmp.ne.s32.totalorder %s68, %s69
      %p80 = scmp.eq.s32.totalorder %s22, 0
      %p81 = por %p79, %p80
      %p82 = scmp.ne.s32.totalorder %s68, %s69
      %p83 = scmp.eq.s32.totalorder %s23, 3
      %p84 = por %p82, %p83
      %p86 = scmp.ne.s32.totalorder %s69, %s85
      %p87 = scmp.eq.s32.totalorder %s23, 0
      %p88 = por %p86, %p87
      %s89 = ssub.s32 %s24, %s36
      %p90 = scmp.eq.s32.totalorder %s89, 0
      %s92 = sadd.s32 %s91, 1
      %s93 = scalar_select %p90, %s91, %s92
      %p96 = pneg %p90
      %p97 = scmp.eq.s32.totalorder %s17, 3
      %p98 = por %p96, %p97
      %p99 = scmp.ne.s32.totalorder %s91, %s94
      %p100 = scmp.eq.s32.totalorder %s17, 0
      %p101 = por %p99, %p100
      %p102 = scmp.ne.s32.totalorder %s91, %s94
      %p103 = scmp.eq.s32.totalorder %s22, 3
      %p104 = por %p102, %p103
      %p105 = scmp.ne.s32.totalorder %s94, %s95
      %p106 = scmp.eq.s32.totalorder %s22, 0
      %p107 = por %p105, %p106
      %p108 = scmp.ne.s32.totalorder %s94, %s95
      %p109 = scmp.eq.s32.totalorder %s23, 3
      %p110 = por %p108, %p109
      %p112 = scmp.ne.s32.totalorder %s95, %s111
      %p113 = scmp.eq.s32.totalorder %s23, 0
      %p114 = por %p112, %p113
      %p115 = scmp.le.s32.totalorder 1, %s17
      %p116 = scmp.lt.s32.totalorder %s17, 5
      %p117 = pnand %p115, %p116
      %p118 = pneg %p117
      // Predicated region
      $region9: #{tpu_custom_call.1} parent=5 // pred_check
        _
      $region10: #{tpu_custom_call.1} parent=5 // pred_check_branch
        %120 = sbr.rel (%p117) target = $region12
      $region11: #{tpu_custom_call.1} parent=5 // pred_region
        %s121 = ssub.s32 %s17, 1
      $region12: #{tpu_custom_call.1} parent=5 // pred_fallthru
        _
      %p122 = scmp.lt.s32.totalorder %s17, 4
      // Predicated region
      $region13: #{tpu_custom_call.1} parent=5 // pred_check
        %p123 = pneg %p122
      $region14: #{tpu_custom_call.1} parent=5 // pred_check_branch
        %125 = sbr.rel (%p123) target = $region16
      $region15: #{tpu_custom_call.1} parent=5 // pred_region
        // Predicated region
        $region17: #{tpu_custom_call.1} parent=15 // pred_check
          %p126 = pneg %p49
        $region18: #{tpu_custom_call.1} parent=15 // pred_check_branch
          %128 = sbr.rel (%p126) target = $region20
        $region19: #{tpu_custom_call.1} parent=15 // pred_region
          %s129 = sand.u32 %s39, 1
          %s130 = scalar_lea.sflag [#allocation3], %s129
          %s131 = sand.u32 %s39, 1
          %s132 = smul.addr %s131, 256
          %s133 = scalar_lea.vmem [#allocation2], %s132
          %s134 = smul.u32 32, %s24
          %s136 = ssub.s32 4096, 4096
          %137 = vsyncadd %s130, %s136
          %s138 = smul.addr %s134, 128
          %s139 = scalar_lea.hbm %s0, %s138
          %s140 = sshll.u32 %s133, 4
          %s141 = int_to_ptr.vmem [resolvable:$true] %s140
          %146 = dma.hbm_to_vmem [thread:$0]  %s139, 4096, %s141, %s130, 128, 128, 8
        $region20: #{tpu_custom_call.1} parent=15 // pred_fallthru
          _
        // Predicated region
        $region21: #{tpu_custom_call.1} parent=15 // pred_check
          %p147 = pneg %p75
        $region22: #{tpu_custom_call.1} parent=15 // pred_check_branch
          %149 = sbr.rel (%p147) target = $region24
        $region23: #{tpu_custom_call.1} parent=15 // pred_region
          %s150 = sand.u32 %s65, 1
          %s151 = scalar_lea.sflag [#allocation6], %s150
          %s152 = sand.u32 %s65, 1
          %s153 = smul.addr %s152, 256
          %s154 = scalar_lea.vmem [#allocation5], %s153
          %s155 = smul.u32 32, %s25
          %s157 = ssub.s32 4096, 4096
          %158 = vsyncadd %s151, %s157
          %s159 = smul.addr %s155, 128
          %s160 = scalar_lea.hbm %s1, %s159
          %s161 = sshll.u32 %s154, 4
          %s162 = int_to_ptr.vmem [resolvable:$true] %s161
          %167 = dma.hbm_to_vmem [thread:$0]  %s160, 4096, %s162, %s151, 128, 128, 8
        $region24: #{tpu_custom_call.1} parent=15 // pred_fallthru
          _
      $region16: #{tpu_custom_call.1} parent=5 // pred_fallthru
        _
      %p168 = scmp.le.s32.totalorder 1, %s17
      %p169 = scmp.lt.s32.totalorder %s17, 5
      %p170 = pnand %p168, %p169
      %p171 = pneg %p170
      // Predicated region
      $region25: #{tpu_custom_call.1} parent=5 // pred_check
        _
      $region26: #{tpu_custom_call.1} parent=5 // pred_check_branch
        %173 = sbr.rel (%p170) target = $region28
      $region27: #{tpu_custom_call.1} parent=5 // pred_region
        %s174 = ssub.s32 %s17, 1
        %s175 = sand.u32 %s42, 1
        %s176 = scalar_lea.sflag [#allocation3], %s175
        %s177 = sand.u32 %s42, 1
        %s178 = smul.addr %s177, 256
        %s179 = scalar_lea.vmem [#allocation2], %s178
        // Predicated region
        $region29: #{tpu_custom_call.1} parent=27 // pred_check
          %p180 = pneg %p55
        $region30: #{tpu_custom_call.1} parent=27 // pred_check_branch
          %182 = sbr.rel (%p180) target = $region32
        $region31: #{tpu_custom_call.1} parent=27 // pred_region
          %183 = dma.done %s176, 4096
        $region32: #{tpu_custom_call.1} parent=27 // pred_fallthru
          _
        %s184 = sand.u32 %s68, 1
        %s185 = scalar_lea.sflag [#allocation6], %s184
        %s186 = sand.u32 %s68, 1
        %s187 = smul.addr %s186, 256
        %s188 = scalar_lea.vmem [#allocation5], %s187
        // Predicated region
        $region33: #{tpu_custom_call.1} parent=27 // pred_check
          %p189 = pneg %p81
        $region34: #{tpu_custom_call.1} parent=27 // pred_check_branch
          %191 = sbr.rel (%p189) target = $region36
        $region35: #{tpu_custom_call.1} parent=27 // pred_region
          %192 = dma.done %s185, 4096
        $region36: #{tpu_custom_call.1} parent=27 // pred_fallthru
          _
        %s193 = sand.u32 %s42, 1
        %s194 = scalar_lea.sflag [#allocation3], %s193
        %s195 = sand.u32 %s42, 1
        %s196 = smul.addr %s195, 256
        %s197 = scalar_lea.vmem [#allocation2], %s196
        %p198 = pneg %p55
        %p199 = pneg %p52
        %s200 = sand.u32 %s68, 1
        %s201 = scalar_lea.sflag [#allocation6], %s200
        %s202 = sand.u32 %s68, 1
        %s203 = smul.addr %s202, 256
        %s204 = scalar_lea.vmem [#allocation5], %s203
        %p205 = pneg %p81
        %p206 = pneg %p78
        %p207 = pneg %p107
        %p208 = pneg %p104
        %s209 = sand.u32 %s94, 1
        %s210 = scalar_lea.sflag [#allocation4], %s209
        %s211 = sand.u32 %s94, 1
        %s212 = smul.addr %s211, 256
        %s213 = scalar_lea.vmem [#allocation7], %s212
        %s214 = smul.u32 32, %s26
        %s215 = smul.u32 32, %s27
        %s216 = smul.u32 32, %s26
        %p217 = scmp.eq.s32.totalorder %s27, 0
        // Predicated region
        $region37: #{tpu_custom_call.1} parent=27 // pred_check
          %p218 = pneg %p217
        $region38: #{tpu_custom_call.1} parent=27 // pred_check_branch
          %220 = sbr.rel (%p218) target = $region40
        $region39: #{tpu_custom_call.1} parent=27 // pred_region
          %221 = vst [vmem:[%s213] sm:$0xff] 0.0
          %222 = vst [vmem:[%s213 + $0x8] sm:$0xff] 0.0
          %223 = vst [vmem:[%s213 + $0x10] sm:$0xff] 0.0
          %224 = vst [vmem:[%s213 + $0x18] sm:$0xff] 0.0
          %225 = vst [vmem:[%s213 + $0x20] sm:$0xff] 0.0
          %226 = vst [vmem:[%s213 + $0x28] sm:$0xff] 0.0
          %227 = vst [vmem:[%s213 + $0x30] sm:$0xff] 0.0
          %228 = vst [vmem:[%s213 + $0x38] sm:$0xff] 0.0
          %229 = vst [vmem:[%s213 + $0x40] sm:$0xff] 0.0
          %230 = vst [vmem:[%s213 + $0x48] sm:$0xff] 0.0
          %231 = vst [vmem:[%s213 + $0x50] sm:$0xff] 0.0
          %232 = vst [vmem:[%s213 + $0x58] sm:$0xff] 0.0
          %233 = vst [vmem:[%s213 + $0x60] sm:$0xff] 0.0
          %234 = vst [vmem:[%s213 + $0x68] sm:$0xff] 0.0
          %235 = vst [vmem:[%s213 + $0x70] sm:$0xff] 0.0
          %236 = vst [vmem:[%s213 + $0x78] sm:$0xff] 0.0
          %237 = vst [vmem:[%s213 + $0x80] sm:$0xff] 0.0
          %238 = vst [vmem:[%s213 + $0x88] sm:$0xff] 0.0
          %239 = vst [vmem:[%s213 + $0x90] sm:$0xff] 0.0
          %240 = vst [vmem:[%s213 + $0x98] sm:$0xff] 0.0
          %241 = vst [vmem:[%s213 + $0xa0] sm:$0xff] 0.0
          %242 = vst [vmem:[%s213 + $0xa8] sm:$0xff] 0.0
          %243 = vst [vmem:[%s213 + $0xb0] sm:$0xff] 0.0
          %244 = vst [vmem:[%s213 + $0xb8] sm:$0xff] 0.0
          %245 = vst [vmem:[%s213 + $0xc0] sm:$0xff] 0.0
          %246 = vst [vmem:[%s213 + $0xc8] sm:$0xff] 0.0
          %247 = vst [vmem:[%s213 + $0xd0] sm:$0xff] 0.0
          %248 = vst [vmem:[%s213 + $0xd8] sm:$0xff] 0.0
          %249 = vst [vmem:[%s213 + $0xe0] sm:$0xff] 0.0
          %250 = vst [vmem:[%s213 + $0xe8] sm:$0xff] 0.0
          %251 = vst [vmem:[%s213 + $0xf0] sm:$0xff] 0.0
          %252 = vst [vmem:[%s213 + $0xf8] sm:$0xff] 0.0
        $region40: #{tpu_custom_call.1} parent=27 // pred_fallthru
          _
        %v253 = vld [vmem:[%s179] sm:$0xff]
        %v254 = vld [vmem:[%s179 + $0x8] sm:$0xff]
        %v255 = vld [vmem:[%s179 + $0x10] sm:$0xff]
        %v256 = vld [vmem:[%s179 + $0x18] sm:$0xff]
        %v257 = vld [vmem:[%s179 + $0x20] sm:$0xff]
        %v258 = vld [vmem:[%s179 + $0x28] sm:$0xff]
        %v259 = vld [vmem:[%s179 + $0x30] sm:$0xff]
        %v260 = vld [vmem:[%s179 + $0x38] sm:$0xff]
        %v261 = vld [vmem:[%s179 + $0x40] sm:$0xff]
        %v262 = vld [vmem:[%s179 + $0x48] sm:$0xff]
        %v263 = vld [vmem:[%s179 + $0x50] sm:$0xff]
        %v264 = vld [vmem:[%s179 + $0x58] sm:$0xff]
        %v265 = vld [vmem:[%s179 + $0x60] sm:$0xff]
        %v266 = vld [vmem:[%s179 + $0x68] sm:$0xff]
        %v267 = vld [vmem:[%s179 + $0x70] sm:$0xff]
        %v268 = vld [vmem:[%s179 + $0x78] sm:$0xff]
        %v269 = vld [vmem:[%s179 + $0x80] sm:$0xff]
        %v270 = vld [vmem:[%s179 + $0x88] sm:$0xff]
        %v271 = vld [vmem:[%s179 + $0x90] sm:$0xff]
        %v272 = vld [vmem:[%s179 + $0x98] sm:$0xff]
        %v273 = vld [vmem:[%s179 + $0xa0] sm:$0xff]
        %v274 = vld [vmem:[%s179 + $0xa8] sm:$0xff]
        %v275 = vld [vmem:[%s179 + $0xb0] sm:$0xff]
        %v276 = vld [vmem:[%s179 + $0xb8] sm:$0xff]
        %v277 = vld [vmem:[%s179 + $0xc0] sm:$0xff]
        %v278 = vld [vmem:[%s179 + $0xc8] sm:$0xff]
        %v279 = vld [vmem:[%s179 + $0xd0] sm:$0xff]
        %v280 = vld [vmem:[%s179 + $0xd8] sm:$0xff]
        %v281 = vld [vmem:[%s179 + $0xe0] sm:$0xff]
        %v282 = vld [vmem:[%s179 + $0xe8] sm:$0xff]
        %v283 = vld [vmem:[%s179 + $0xf0] sm:$0xff]
        %v284 = vld [vmem:[%s179 + $0xf8] sm:$0xff]
        %v285 = vld [vmem:[%s188] sm:$0xff]
        %v286 = vld [vmem:[%s188 + $0x8] sm:$0xff]
        %v287 = vld [vmem:[%s188 + $0x10] sm:$0xff]
        %v288 = vld [vmem:[%s188 + $0x18] sm:$0xff]
        %v289 = vld [vmem:[%s188 + $0x20] sm:$0xff]
        %v290 = vld [vmem:[%s188 + $0x28] sm:$0xff]
        %v291 = vld [vmem:[%s188 + $0x30] sm:$0xff]
        %v292 = vld [vmem:[%s188 + $0x38] sm:$0xff]
        %v293 = vld [vmem:[%s188 + $0x40] sm:$0xff]
        %v294 = vld [vmem:[%s188 + $0x48] sm:$0xff]
        %v295 = vld [vmem:[%s188 + $0x50] sm:$0xff]
        %v296 = vld [vmem:[%s188 + $0x58] sm:$0xff]
        %v297 = vld [vmem:[%s188 + $0x60] sm:$0xff]
        %v298 = vld [vmem:[%s188 + $0x68] sm:$0xff]
        %v299 = vld [vmem:[%s188 + $0x70] sm:$0xff]
        %v300 = vld [vmem:[%s188 + $0x78] sm:$0xff]
        %v301 = vld [vmem:[%s188 + $0x80] sm:$0xff]
        %v302 = vld [vmem:[%s188 + $0x88] sm:$0xff]
        %v303 = vld [vmem:[%s188 + $0x90] sm:$0xff]
        %v304 = vld [vmem:[%s188 + $0x98] sm:$0xff]
        %v305 = vld [vmem:[%s188 + $0xa0] sm:$0xff]
        %v306 = vld [vmem:[%s188 + $0xa8] sm:$0xff]
        %v307 = vld [vmem:[%s188 + $0xb0] sm:$0xff]
        %v308 = vld [vmem:[%s188 + $0xb8] sm:$0xff]
        %v309 = vld [vmem:[%s188 + $0xc0] sm:$0xff]
        %v310 = vld [vmem:[%s188 + $0xc8] sm:$0xff]
        %v311 = vld [vmem:[%s188 + $0xd0] sm:$0xff]
        %v312 = vld [vmem:[%s188 + $0xd8] sm:$0xff]
        %v313 = vld [vmem:[%s188 + $0xe0] sm:$0xff]
        %v314 = vld [vmem:[%s188 + $0xe8] sm:$0xff]
        %v315 = vld [vmem:[%s188 + $0xf0] sm:$0xff]
        %v316 = vld [vmem:[%s188 + $0xf8] sm:$0xff]
        %317 = vmatprep.subr.mxu0 0.0
        %318 = vmatpush1.xpose.msra.mxu0 %v300
        %319 = vmatprep.subr.mxu0 0.0
        %320 = vmatpush1.xpose.msra.mxu0 %v299
        %321 = vmatprep.subr.mxu0 0.0
        %322 = vmatpush1.xpose.msra.mxu0 %v298
        %323 = vmatprep.subr.mxu0 0.0
        %324 = vmatpush1.xpose.msra.mxu0 %v297
        %325 = vmatprep.subr.mxu0 0.0
        %326 = vmatpush1.xpose.msra.mxu0 %v296
        %327 = vmatprep.subr.mxu0 0.0
        %328 = vmatpush1.xpose.msra.mxu0 %v295
        %329 = vmatprep.subr.mxu0 0.0
        %330 = vmatpush1.xpose.msra.mxu0 %v294
        %331 = vmatprep.subr.mxu0 0.0
        %332 = vmatpush1.xpose.msra.mxu0 %v293
        %333 = vmatprep.subr.mxu0 0.0
        %334 = vmatpush1.xpose.msra.mxu0 %v292
        %335 = vmatprep.subr.mxu0 0.0
        %336 = vmatpush1.xpose.msra.mxu0 %v291
        %337 = vmatprep.subr.mxu0 0.0
        %338 = vmatpush1.xpose.msra.mxu0 %v290
        %339 = vmatprep.subr.mxu0 0.0
        %340 = vmatpush1.xpose.msra.mxu0 %v289
        %341 = vmatprep.subr.mxu0 0.0
        %342 = vmatpush1.xpose.msra.mxu0 %v288
        %343 = vmatprep.subr.mxu0 0.0
        %344 = vmatpush1.xpose.msra.mxu0 %v287
        %345 = vmatprep.subr.mxu0 0.0
        %346 = vmatpush1.xpose.msra.mxu0 %v286
        %347 = vmatprep.subr.mxu0 0.0
        %348 = vmatpush1.xpose.msra.mxu0 %v285
        %349 = vmatprep.subr.mxu0 0.0
        %350 = vmatpush2.xpose.msra.mxu0 %v316
        %351 = vmatprep.subr.mxu0 0.0
        %352 = vmatpush2.xpose.msra.mxu0 %v315
        %353 = vmatprep.subr.mxu0 0.0
        %354 = vmatpush2.xpose.msra.mxu0 %v314
        %355 = vmatprep.subr.mxu0 0.0
        %356 = vmatpush2.xpose.msra.mxu0 %v313
        %357 = vmatprep.subr.mxu0 0.0
        %358 = vmatpush2.xpose.msra.mxu0 %v312
        %359 = vmatprep.subr.mxu0 0.0
        %360 = vmatpush2.xpose.msra.mxu0 %v311
        %361 = vmatprep.subr.mxu0 0.0
        %362 = vmatpush2.xpose.msra.mxu0 %v310
        %363 = vmatprep.subr.mxu0 0.0
        %364 = vmatpush2.xpose.msra.mxu0 %v309
        %365 = vmatprep.subr.mxu0 0.0
        %366 = vmatpush2.xpose.msra.mxu0 %v308
        %367 = vmatprep.subr.mxu0 0.0
        %368 = vmatpush2.xpose.msra.mxu0 %v307
        %369 = vmatprep.subr.mxu0 0.0
        %370 = vmatpush2.xpose.msra.mxu0 %v306
        %371 = vmatprep.subr.mxu0 0.0
        %372 = vmatpush2.xpose.msra.mxu0 %v305
        %373 = vmatprep.subr.mxu0 0.0
        %374 = vmatpush2.xpose.msra.mxu0 %v304
        %375 = vmatprep.subr.mxu0 0.0
        %376 = vmatpush2.xpose.msra.mxu0 %v303
        %377 = vmatprep.subr.mxu0 0.0
        %378 = vmatpush2.xpose.msra.mxu0 %v302
        %379 = vmatprep.subr.mxu0 0.0
        %380 = vmatpush2.xpose.msra.mxu0 %v301
        %381 = vmatprep.mubr.f32.mxu0 0.0
        %382 = vmatmul.mubr.f32.gmra.mxu0 %v253
        %v383 = vpop.f32.mrf.mxu0
        %v384 = vadd.f32 0.0, %v383
        %v385 = vpop.f32.mrf.mxu0
        %v386 = vadd.f32 0.0, %v385
        %387 = vmatprep.mubr.f32.mxu0 0.0
        %388 = vmatmul.mubr.f32.gmra.mxu0 %v254
        %v389 = vpop.f32.mrf.mxu0
        %v390 = vadd.f32 0.0, %v389
        %v391 = vpop.f32.mrf.mxu0
        %v392 = vadd.f32 0.0, %v391
        %393 = vmatprep.mubr.f32.mxu0 0.0
        %394 = vmatmul.mubr.f32.gmra.mxu0 %v255
        %v395 = vpop.f32.mrf.mxu0
        %v396 = vadd.f32 0.0, %v395
        %v397 = vpop.f32.mrf.mxu0
        %v398 = vadd.f32 0.0, %v397
        %399 = vmatprep.mubr.f32.mxu0 0.0
        %400 = vmatmul.mubr.f32.gmra.mxu0 %v256
        %v401 = vpop.f32.mrf.mxu0
        %v402 = vadd.f32 0.0, %v401
        %v403 = vpop.f32.mrf.mxu0
        %v404 = vadd.f32 0.0, %v403
        %405 = vmatprep.mubr.f32.mxu0 0.0
        %406 = vmatmul.mubr.f32.gmra.mxu0 %v257
        %v407 = vpop.f32.mrf.mxu0
        %v408 = vadd.f32 0.0, %v407
        %v409 = vpop.f32.mrf.mxu0
        %v410 = vadd.f32 0.0, %v409
        %411 = vmatprep.mubr.f32.mxu0 0.0
        %412 = vmatmul.mubr.f32.gmra.mxu0 %v258
        %v413 = vpop.f32.mrf.mxu0
        %v414 = vadd.f32 0.0, %v413
        %v415 = vpop.f32.mrf.mxu0
        %v416 = vadd.f32 0.0, %v415
        %417 = vmatprep.mubr.f32.mxu0 0.0
        %418 = vmatmul.mubr.f32.gmra.mxu0 %v259
        %v419 = vpop.f32.mrf.mxu0
        %v420 = vadd.f32 0.0, %v419
        %v421 = vpop.f32.mrf.mxu0
        %v422 = vadd.f32 0.0, %v421
        %423 = vmatprep.mubr.f32.mxu0 0.0
        %424 = vmatmul.mubr.f32.gmra.mxu0 %v260
        %v425 = vpop.f32.mrf.mxu0
        %v426 = vadd.f32 0.0, %v425
        %v427 = vpop.f32.mrf.mxu0
        %v428 = vadd.f32 0.0, %v427
        %429 = vmatprep.mubr.f32.mxu0 0.0
        %430 = vmatmul.mubr.f32.gmra.mxu0 %v261
        %v431 = vpop.f32.mrf.mxu0
        %v432 = vadd.f32 0.0, %v431
        %v433 = vpop.f32.mrf.mxu0
        %v434 = vadd.f32 0.0, %v433
        %435 = vmatprep.mubr.f32.mxu0 0.0
        %436 = vmatmul.mubr.f32.gmra.mxu0 %v262
        %v437 = vpop.f32.mrf.mxu0
        %v438 = vadd.f32 0.0, %v437
        %v439 = vpop.f32.mrf.mxu0
        %v440 = vadd.f32 0.0, %v439
        %441 = vmatprep.mubr.f32.mxu0 0.0
        %442 = vmatmul.mubr.f32.gmra.mxu0 %v263
        %v443 = vpop.f32.mrf.mxu0
        %v444 = vadd.f32 0.0, %v443
        %v445 = vpop.f32.mrf.mxu0
        %v446 = vadd.f32 0.0, %v445
        %447 = vmatprep.mubr.f32.mxu0 0.0
        %448 = vmatmul.mubr.f32.gmra.mxu0 %v264
        %v449 = vpop.f32.mrf.mxu0
        %v450 = vadd.f32 0.0, %v449
        %v451 = vpop.f32.mrf.mxu0
        %v452 = vadd.f32 0.0, %v451
        %453 = vmatprep.mubr.f32.mxu0 0.0
        %454 = vmatmul.mubr.f32.gmra.mxu0 %v265
        %v455 = vpop.f32.mrf.mxu0
        %v456 = vadd.f32 0.0, %v455
        %v457 = vpop.f32.mrf.mxu0
        %v458 = vadd.f32 0.0, %v457
        %459 = vmatprep.mubr.f32.mxu0 0.0
        %460 = vmatmul.mubr.f32.gmra.mxu0 %v266
        %v461 = vpop.f32.mrf.mxu0
        %v462 = vadd.f32 0.0, %v461
        %v463 = vpop.f32.mrf.mxu0
        %v464 = vadd.f32 0.0, %v463
        %465 = vmatprep.mubr.f32.mxu0 0.0
        %466 = vmatmul.mubr.f32.gmra.mxu0 %v267
        %v467 = vpop.f32.mrf.mxu0
        %v468 = vadd.f32 0.0, %v467
        %v469 = vpop.f32.mrf.mxu0
        %v470 = vadd.f32 0.0, %v469
        %471 = vmatprep.mubr.f32.mxu0 0.0
        %472 = vmatmul.mubr.f32.gmra.mxu0 %v268
        %v473 = vpop.f32.mrf.mxu0
        %v474 = vadd.f32 0.0, %v473
        %v475 = vpop.f32.mrf.mxu0
        %v476 = vadd.f32 0.0, %v475
        %477 = vmatprep.mubr.f32.mxu0 0.0
        %478 = vmatmul.mubr.f32.gmra.mxu0 %v269
        %v479 = vpop.f32.mrf.mxu0
        %v480 = vadd.f32 0.0, %v479
        %v481 = vpop.f32.mrf.mxu0
        %v482 = vadd.f32 0.0, %v481
        %483 = vmatprep.mubr.f32.mxu0 0.0
        %484 = vmatmul.mubr.f32.gmra.mxu0 %v270
        %v485 = vpop.f32.mrf.mxu0
        %v486 = vadd.f32 0.0, %v485
        %v487 = vpop.f32.mrf.mxu0
        %v488 = vadd.f32 0.0, %v487
        %489 = vmatprep.mubr.f32.mxu0 0.0
        %490 = vmatmul.mubr.f32.gmra.mxu0 %v271
        %v491 = vpop.f32.mrf.mxu0
        %v492 = vadd.f32 0.0, %v491
        %v493 = vpop.f32.mrf.mxu0
        %v494 = vadd.f32 0.0, %v493
        %495 = vmatprep.mubr.f32.mxu0 0.0
        %496 = vmatmul.mubr.f32.gmra.mxu0 %v272
        %v497 = vpop.f32.mrf.mxu0
        %v498 = vadd.f32 0.0, %v497
        %v499 = vpop.f32.mrf.mxu0
        %v500 = vadd.f32 0.0, %v499
        %501 = vmatprep.mubr.f32.mxu0 0.0
        %502 = vmatmul.mubr.f32.gmra.mxu0 %v273
        %v503 = vpop.f32.mrf.mxu0
        %v504 = vadd.f32 0.0, %v503
        %v505 = vpop.f32.mrf.mxu0
        %v506 = vadd.f32 0.0, %v505
        %507 = vmatprep.mubr.f32.mxu0 0.0
        %508 = vmatmul.mubr.f32.gmra.mxu0 %v274
        %v509 = vpop.f32.mrf.mxu0
        %v510 = vadd.f32 0.0, %v509
        %v511 = vpop.f32.mrf.mxu0
        %v512 = vadd.f32 0.0, %v511
        %513 = vmatprep.mubr.f32.mxu0 0.0
        %514 = vmatmul.mubr.f32.gmra.mxu0 %v275
        %v515 = vpop.f32.mrf.mxu0
        %v516 = vadd.f32 0.0, %v515
        %v517 = vpop.f32.mrf.mxu0
        %v518 = vadd.f32 0.0, %v517
        %519 = vmatprep.mubr.f32.mxu0 0.0
        %520 = vmatmul.mubr.f32.gmra.mxu0 %v276
        %v521 = vpop.f32.mrf.mxu0
        %v522 = vadd.f32 0.0, %v521
        %v523 = vpop.f32.mrf.mxu0
        %v524 = vadd.f32 0.0, %v523
        %525 = vmatprep.mubr.f32.mxu0 0.0
        %526 = vmatmul.mubr.f32.gmra.mxu0 %v277
        %v527 = vpop.f32.mrf.mxu0
        %v528 = vadd.f32 0.0, %v527
        %v529 = vpop.f32.mrf.mxu0
        %v530 = vadd.f32 0.0, %v529
        %531 = vmatprep.mubr.f32.mxu0 0.0
        %532 = vmatmul.mubr.f32.gmra.mxu0 %v278
        %v533 = vpop.f32.mrf.mxu0
        %v534 = vadd.f32 0.0, %v533
        %v535 = vpop.f32.mrf.mxu0
        %v536 = vadd.f32 0.0, %v535
        %537 = vmatprep.mubr.f32.mxu0 0.0
        %538 = vmatmul.mubr.f32.gmra.mxu0 %v279
        %v539 = vpop.f32.mrf.mxu0
        %v540 = vadd.f32 0.0, %v539
        %v541 = vpop.f32.mrf.mxu0
        %v542 = vadd.f32 0.0, %v541
        %543 = vmatprep.mubr.f32.mxu0 0.0
        %544 = vmatmul.mubr.f32.gmra.mxu0 %v280
        %v545 = vpop.f32.mrf.mxu0
        %v546 = vadd.f32 0.0, %v545
        %v547 = vpop.f32.mrf.mxu0
        %v548 = vadd.f32 0.0, %v547
        %549 = vmatprep.mubr.f32.mxu0 0.0
        %550 = vmatmul.mubr.f32.gmra.mxu0 %v281
        %v551 = vpop.f32.mrf.mxu0
        %v552 = vadd.f32 0.0, %v551
        %v553 = vpop.f32.mrf.mxu0
        %v554 = vadd.f32 0.0, %v553
        %555 = vmatprep.mubr.f32.mxu0 0.0
        %556 = vmatmul.mubr.f32.gmra.mxu0 %v282
        %v557 = vpop.f32.mrf.mxu0
        %v558 = vadd.f32 0.0, %v557
        %v559 = vpop.f32.mrf.mxu0
        %v560 = vadd.f32 0.0, %v559
        %561 = vmatprep.mubr.f32.mxu0 0.0
        %562 = vmatmul.mubr.f32.gmra.mxu0 %v283
        %v563 = vpop.f32.mrf.mxu0
        %v564 = vadd.f32 0.0, %v563
        %v565 = vpop.f32.mrf.mxu0
        %v566 = vadd.f32 0.0, %v565
        %567 = vmatprep.mubr.f32.mxu0 0.0
        %568 = vmatmul.mubr.f32.gmra.mxu0 %v284
        %v569 = vpop.f32.mrf.mxu0
        %v570 = vadd.f32 0.0, %v569
        %v571 = vpop.f32.mrf.mxu0
        %v572 = vadd.f32 0.0, %v571
        %573 = vdwg.mxu0
        %v574 = vmul.f32 %v384, 1.442695
        %v575 = vpow.pop %v574
        %v576 = vmul.f32 %v386, 1.442695
        %v577 = vpow.pop %v576
        %v578 = vmul.f32 %v390, 1.442695
        %v579 = vpow.pop %v578
        %v580 = vmul.f32 %v392, 1.442695
        %v581 = vpow.pop %v580
        %v582 = vmul.f32 %v396, 1.442695
        %v583 = vpow.pop %v582
        %v584 = vmul.f32 %v398, 1.442695
        %v585 = vpow.pop %v584
        %v586 = vmul.f32 %v402, 1.442695
        %v587 = vpow.pop %v586
        %v588 = vmul.f32 %v404, 1.442695
        %v589 = vpow.pop %v588
        %v590 = vmul.f32 %v408, 1.442695
        %v591 = vpow.pop %v590
        %v592 = vmul.f32 %v410, 1.442695
        %v593 = vpow.pop %v592
        %v594 = vmul.f32 %v414, 1.442695
        %v595 = vpow.pop %v594
        %v596 = vmul.f32 %v416, 1.442695
        %v597 = vpow.pop %v596
        %v598 = vmul.f32 %v420, 1.442695
        %v599 = vpow.pop %v598
        %v600 = vmul.f32 %v422, 1.442695
        %v601 = vpow.pop %v600
        %v602 = vmul.f32 %v426, 1.442695
        %v603 = vpow.pop %v602
        %v604 = vmul.f32 %v428, 1.442695
        %v605 = vpow.pop %v604
        %v606 = vmul.f32 %v432, 1.442695
        %v607 = vpow.pop %v606
        %v608 = vmul.f32 %v434, 1.442695
        %v609 = vpow.pop %v608
        %v610 = vmul.f32 %v438, 1.442695
        %v611 = vpow.pop %v610
        %v612 = vmul.f32 %v440, 1.442695
        %v613 = vpow.pop %v612
        %v614 = vmul.f32 %v444, 1.442695
        %v615 = vpow.pop %v614
        %v616 = vmul.f32 %v446, 1.442695
        %v617 = vpow.pop %v616
        %v618 = vmul.f32 %v450, 1.442695
        %v619 = vpow.pop %v618
        %v620 = vmul.f32 %v452, 1.442695
        %v621 = vpow.pop %v620
        %v622 = vmul.f32 %v456, 1.442695
        %v623 = vpow.pop %v622
        %v624 = vmul.f32 %v458, 1.442695
        %v625 = vpow.pop %v624
        %v626 = vmul.f32 %v462, 1.442695
        %v627 = vpow.pop %v626
        %v628 = vmul.f32 %v464, 1.442695
        %v629 = vpow.pop %v628
        %v630 = vmul.f32 %v468, 1.442695
        %v631 = vpow.pop %v630
        %v632 = vmul.f32 %v470, 1.442695
        %v633 = vpow.pop %v632
        %v634 = vmul.f32 %v474, 1.442695
        %v635 = vpow.pop %v634
        %v636 = vmul.f32 %v476, 1.442695
        %v637 = vpow.pop %v636
        %v638 = vmul.f32 %v480, 1.442695
        %v639 = vpow.pop %v638
        %v640 = vmul.f32 %v482, 1.442695
        %v641 = vpow.pop %v640
        %v642 = vmul.f32 %v486, 1.442695
        %v643 = vpow.pop %v642
        %v644 = vmul.f32 %v488, 1.442695
        %v645 = vpow.pop %v644
        %v646 = vmul.f32 %v492, 1.442695
        %v647 = vpow.pop %v646
        %v648 = vmul.f32 %v494, 1.442695
        %v649 = vpow.pop %v648
        %v650 = vmul.f32 %v498, 1.442695
        %v651 = vpow.pop %v650
        %v652 = vmul.f32 %v500, 1.442695
        %v653 = vpow.pop %v652
        %v654 = vmul.f32 %v504, 1.442695
        %v655 = vpow.pop %v654
        %v656 = vmul.f32 %v506, 1.442695
        %v657 = vpow.pop %v656
        %v658 = vmul.f32 %v510, 1.442695
        %v659 = vpow.pop %v658
        %v660 = vmul.f32 %v512, 1.442695
        %v661 = vpow.pop %v660
        %v662 = vmul.f32 %v516, 1.442695
        %v663 = vpow.pop %v662
        %v664 = vmul.f32 %v518, 1.442695
        %v665 = vpow.pop %v664
        %v666 = vmul.f32 %v522, 1.442695
        %v667 = vpow.pop %v666
        %v668 = vmul.f32 %v524, 1.442695
        %v669 = vpow.pop %v668
        %v670 = vmul.f32 %v528, 1.442695
        %v671 = vpow.pop %v670
        %v672 = vmul.f32 %v530, 1.442695
        %v673 = vpow.pop %v672
        %v674 = vmul.f32 %v534, 1.442695
        %v675 = vpow.pop %v674
        %v676 = vmul.f32 %v536, 1.442695
        %v677 = vpow.pop %v676
        %v678 = vmul.f32 %v540, 1.442695
        %v679 = vpow.pop %v678
        %v680 = vmul.f32 %v542, 1.442695
        %v681 = vpow.pop %v680
        %v682 = vmul.f32 %v546, 1.442695
        %v683 = vpow.pop %v682
        %v684 = vmul.f32 %v548, 1.442695
        %v685 = vpow.pop %v684
        %v686 = vmul.f32 %v552, 1.442695
        %v687 = vpow.pop %v686
        %v688 = vmul.f32 %v554, 1.442695
        %v689 = vpow.pop %v688
        %v690 = vmul.f32 %v558, 1.442695
        %v691 = vpow.pop %v690
        %v692 = vmul.f32 %v560, 1.442695
        %v693 = vpow.pop %v692
        %v694 = vmul.f32 %v564, 1.442695
        %v695 = vpow.pop %v694
        %v696 = vmul.f32 %v566, 1.442695
        %v697 = vpow.pop %v696
        %v698 = vmul.f32 %v570, 1.442695
        %v699 = vpow.pop %v698
        %v700 = vmul.f32 %v572, 1.442695
        %v701 = vpow.pop %v700
        %v702 = vld [vmem:[%s213] sm:$0xff]
        %v703 = vld [vmem:[%s213 + $0x8] sm:$0xff]
        %v704 = vld [vmem:[%s213 + $0x10] sm:$0xff]
        %v705 = vld [vmem:[%s213 + $0x18] sm:$0xff]
        %v706 = vld [vmem:[%s213 + $0x20] sm:$0xff]
        %v707 = vld [vmem:[%s213 + $0x28] sm:$0xff]
        %v708 = vld [vmem:[%s213 + $0x30] sm:$0xff]
        %v709 = vld [vmem:[%s213 + $0x38] sm:$0xff]
        %v710 = vld [vmem:[%s213 + $0x40] sm:$0xff]
        %v711 = vld [vmem:[%s213 + $0x48] sm:$0xff]
        %v712 = vld [vmem:[%s213 + $0x50] sm:$0xff]
        %v713 = vld [vmem:[%s213 + $0x58] sm:$0xff]
        %v714 = vld [vmem:[%s213 + $0x60] sm:$0xff]
        %v715 = vld [vmem:[%s213 + $0x68] sm:$0xff]
        %v716 = vld [vmem:[%s213 + $0x70] sm:$0xff]
        %v717 = vld [vmem:[%s213 + $0x78] sm:$0xff]
        %v718 = vld [vmem:[%s213 + $0x80] sm:$0xff]
        %v719 = vld [vmem:[%s213 + $0x88] sm:$0xff]
        %v720 = vld [vmem:[%s213 + $0x90] sm:$0xff]
        %v721 = vld [vmem:[%s213 + $0x98] sm:$0xff]
        %v722 = vld [vmem:[%s213 + $0xa0] sm:$0xff]
        %v723 = vld [vmem:[%s213 + $0xa8] sm:$0xff]
        %v724 = vld [vmem:[%s213 + $0xb0] sm:$0xff]
        %v725 = vld [vmem:[%s213 + $0xb8] sm:$0xff]
        %v726 = vld [vmem:[%s213 + $0xc0] sm:$0xff]
        %v727 = vld [vmem:[%s213 + $0xc8] sm:$0xff]
        %v728 = vld [vmem:[%s213 + $0xd0] sm:$0xff]
        %v729 = vld [vmem:[%s213 + $0xd8] sm:$0xff]
        %v730 = vld [vmem:[%s213 + $0xe0] sm:$0xff]
        %v731 = vld [vmem:[%s213 + $0xe8] sm:$0xff]
        %v732 = vld [vmem:[%s213 + $0xf0] sm:$0xff]
        %v733 = vld [vmem:[%s213 + $0xf8] sm:$0xff]
        %v734 = vadd.f32 %v702, %v575
        %v735 = vadd.f32 %v703, %v579
        %v736 = vadd.f32 %v704, %v583
        %v737 = vadd.f32 %v705, %v587
        %v738 = vadd.f32 %v706, %v591
        %v739 = vadd.f32 %v707, %v595
        %v740 = vadd.f32 %v708, %v599
        %v741 = vadd.f32 %v709, %v603
        %v742 = vadd.f32 %v710, %v607
        %v743 = vadd.f32 %v711, %v611
        %v744 = vadd.f32 %v712, %v615
        %v745 = vadd.f32 %v713, %v619
        %v746 = vadd.f32 %v714, %v623
        %v747 = vadd.f32 %v715, %v627
        %v748 = vadd.f32 %v716, %v631
        %v749 = vadd.f32 %v717, %v635
        %v750 = vadd.f32 %v718, %v639
        %v751 = vadd.f32 %v719, %v643
        %v752 = vadd.f32 %v720, %v647
        %v753 = vadd.f32 %v721, %v651
        %v754 = vadd.f32 %v722, %v655
        %v755 = vadd.f32 %v723, %v659
        %v756 = vadd.f32 %v724, %v663
        %v757 = vadd.f32 %v725, %v667
        %v758 = vadd.f32 %v726, %v671
        %v759 = vadd.f32 %v727, %v675
        %v760 = vadd.f32 %v728, %v679
        %v761 = vadd.f32 %v729, %v683
        %v762 = vadd.f32 %v730, %v687
        %v763 = vadd.f32 %v731, %v691
        %v764 = vadd.f32 %v732, %v695
        %v765 = vadd.f32 %v733, %v699
        %v766 = vadd.f32 %v734, %v577
        %v767 = vadd.f32 %v735, %v581
        %v768 = vadd.f32 %v736, %v585
        %v769 = vadd.f32 %v737, %v589
        %v770 = vadd.f32 %v738, %v593
        %v771 = vadd.f32 %v739, %v597
        %v772 = vadd.f32 %v740, %v601
        %v773 = vadd.f32 %v741, %v605
        %v774 = vadd.f32 %v742, %v609
        %v775 = vadd.f32 %v743, %v613
        %v776 = vadd.f32 %v744, %v617
        %v777 = vadd.f32 %v745, %v621
        %v778 = vadd.f32 %v746, %v625
        %v779 = vadd.f32 %v747, %v629
        %v780 = vadd.f32 %v748, %v633
        %v781 = vadd.f32 %v749, %v637
        %v782 = vadd.f32 %v750, %v641
        %v783 = vadd.f32 %v751, %v645
        %v784 = vadd.f32 %v752, %v649
        %v785 = vadd.f32 %v753, %v653
        %v786 = vadd.f32 %v754, %v657
        %v787 = vadd.f32 %v755, %v661
        %v788 = vadd.f32 %v756, %v665
        %v789 = vadd.f32 %v757, %v669
        %v790 = vadd.f32 %v758, %v673
        %v791 = vadd.f32 %v759, %v677
        %v792 = vadd.f32 %v760, %v681
        %v793 = vadd.f32 %v761, %v685
        %v794 = vadd.f32 %v762, %v689
        %v795 = vadd.f32 %v763, %v693
        %v796 = vadd.f32 %v764, %v697
        %v797 = vadd.f32 %v765, %v701
        %798 = vst [vmem:[%s213] sm:$0xff] %v766
        %799 = vst [vmem:[%s213 + $0x8] sm:$0xff] %v767
        %800 = vst [vmem:[%s213 + $0x10] sm:$0xff] %v768
        %801 = vst [vmem:[%s213 + $0x18] sm:$0xff] %v769
        %802 = vst [vmem:[%s213 + $0x20] sm:$0xff] %v770
        %803 = vst [vmem:[%s213 + $0x28] sm:$0xff] %v771
        %804 = vst [vmem:[%s213 + $0x30] sm:$0xff] %v772
        %805 = vst [vmem:[%s213 + $0x38] sm:$0xff] %v773
        %806 = vst [vmem:[%s213 + $0x40] sm:$0xff] %v774
        %807 = vst [vmem:[%s213 + $0x48] sm:$0xff] %v775
        %808 = vst [vmem:[%s213 + $0x50] sm:$0xff] %v776
        %809 = vst [vmem:[%s213 + $0x58] sm:$0xff] %v777
        %810 = vst [vmem:[%s213 + $0x60] sm:$0xff] %v778
        %811 = vst [vmem:[%s213 + $0x68] sm:$0xff] %v779
        %812 = vst [vmem:[%s213 + $0x70] sm:$0xff] %v780
        %813 = vst [vmem:[%s213 + $0x78] sm:$0xff] %v781
        %814 = vst [vmem:[%s213 + $0x80] sm:$0xff] %v782
        %815 = vst [vmem:[%s213 + $0x88] sm:$0xff] %v783
        %816 = vst [vmem:[%s213 + $0x90] sm:$0xff] %v784
        %817 = vst [vmem:[%s213 + $0x98] sm:$0xff] %v785
        %818 = vst [vmem:[%s213 + $0xa0] sm:$0xff] %v786
        %819 = vst [vmem:[%s213 + $0xa8] sm:$0xff] %v787
        %820 = vst [vmem:[%s213 + $0xb0] sm:$0xff] %v788
        %821 = vst [vmem:[%s213 + $0xb8] sm:$0xff] %v789
        %822 = vst [vmem:[%s213 + $0xc0] sm:$0xff] %v790
        %823 = vst [vmem:[%s213 + $0xc8] sm:$0xff] %v791
        %824 = vst [vmem:[%s213 + $0xd0] sm:$0xff] %v792
        %825 = vst [vmem:[%s213 + $0xd8] sm:$0xff] %v793
        %826 = vst [vmem:[%s213 + $0xe0] sm:$0xff] %v794
        %827 = vst [vmem:[%s213 + $0xe8] sm:$0xff] %v795
        %828 = vst [vmem:[%s213 + $0xf0] sm:$0xff] %v796
        %829 = vst [vmem:[%s213 + $0xf8] sm:$0xff] %v797
        %s830 = sand.u32 %s94, 1
        %s831 = scalar_lea.sflag [#allocation4], %s830
        %s832 = sand.u32 %s94, 1
        %s833 = smul.addr %s832, 256
        %s834 = scalar_lea.vmem [#allocation7], %s833
        // Predicated region
        $region41: #{tpu_custom_call.1} parent=27 // pred_check
          %p835 = pneg %p104
        $region42: #{tpu_custom_call.1} parent=27 // pred_check_branch
          %837 = sbr.rel (%p835) target = $region44
        $region43: #{tpu_custom_call.1} parent=27 // pred_region
          %s838 = smul.u32 32, %s26
          %s840 = ssub.s32 4096, 4096
          %841 = vsyncadd %s831, %s840
          %s842 = smul.addr %s838, 128
          %s843 = scalar_lea.hbm %s2, %s842
          %s844 = sshll.u32 %s834, 4
          %s845 = int_to_ptr.vmem [resolvable:$true] %s844
          %850 = dma.vmem_to_hbm [thread:$0]  %s845, 4096, %s843, %s831, 128, 128, 8
        $region44: #{tpu_custom_call.1} parent=27 // pred_fallthru
          _
      $region28: #{tpu_custom_call.1} parent=5 // pred_fallthru
        _
      %p851 = scmp.le.s32.totalorder 2, %s17
      // Predicated region
      $region45: #{tpu_custom_call.1} parent=5 // pred_check
        %p852 = pneg %p851
      $region46: #{tpu_custom_call.1} parent=5 // pred_check_branch
        %854 = sbr.rel (%p852) target = $region48
      $region47: #{tpu_custom_call.1} parent=5 // pred_region
        %s855 = ssub.s32 %s17, 2
        // Predicated region
        $region49: #{tpu_custom_call.1} parent=47 // pred_check
          %p856 = pneg %p110
        $region50: #{tpu_custom_call.1} parent=47 // pred_check_branch
          %858 = sbr.rel (%p856) target = $region52
        $region51: #{tpu_custom_call.1} parent=47 // pred_region
          %s859 = sand.u32 %s95, 1
          %s860 = scalar_lea.sflag [#allocation4], %s859
          %s861 = sand.u32 %s95, 1
          %s862 = smul.addr %s861, 256
          %s863 = scalar_lea.vmem [#allocation7], %s862
          %864 = dma.done %s860, 4096
        $region52: #{tpu_custom_call.1} parent=47 // pred_fallthru
          _
      $region48: #{tpu_custom_call.1} parent=5 // pred_fallthru
        _
    $region6: #{tpu_custom_call.1} parent=1 // loop_footer
      %s21 = sadd.s32 1, %s17
    $region7: #{tpu_custom_call.1} parent=1 // loop_footer_branch
      %16 = sbr.rel target = $region3
    $region8: #{tpu_custom_call.1} parent=1 // loop_exit
      _
    %865 = vsyncpa [#allocation3], 1
    %s866 = scalar_lea.sflag [#allocation3], 1
    %867 = vsyncpa %s866, 1
    %868 = vsyncpa [#allocation6], 1
    %s869 = scalar_lea.sflag [#allocation6], 1
    %870 = vsyncpa %s869, 1
    %871 = vsyncpa [#allocation4], 1
    %s872 = scalar_lea.sflag [#allocation4], 1
    %873 = vsyncpa %s872, 1

</llo_original>
